<compile_context>
chip_gen: v7x
topology: tpu7x:2x2x1
jax: 0.10.0
libtpu: 0.0.40
codegen_flags: <defaults>
</compile_context>

<pallas_src>
import functools

import jax
import jax.numpy as jnp
from jax.experimental import pallas as pl
from jax.experimental.pallas import tpu as pltpu


def _round_up(x, m):
    return (x + m - 1) // m * m


# ----------------------------------------------------------------------------
# Pallas kernel: transposed im2col-matmul + fused bias add (Conv3d hot path)
# ----------------------------------------------------------------------------
def _conv_matmul_kernel(w_ref, b_ref, p_ref, o_ref):
    # w_ref: (C_out, K_pad)   resident across the grid (constant index_map)
    # b_ref: (C_out, 1)       resident across the grid
    # p_ref: (K_pad, tm)      patch tile, M on lanes
    # o_ref: (C_out, tm)      lane-dense output tile
    acc = jnp.dot(w_ref[...], p_ref[...], preferred_element_type=jnp.float32)
    o_ref[...] = (acc + b_ref[...]).astype(o_ref.dtype)


def _pallas_conv_matmul(patches, w_mat, bias, *, tm_max=512):
    """patches: (Nb, K, Mn); w_mat: (C_out, K); bias: (C_out,) -> (Nb, C_out, Mn)."""
    Nb, K, Mn = patches.shape
    C_out = w_mat.shape[0]

    # Pad the contraction dim to 128 so every tile is (8,128)-aligned.
    K_pad = _round_up(K, 128)

    # M tile: as large as possible (multiple of 128), capped at tm_max.
    tm = min(tm_max, _round_up(Mn, 128))

    # v7x has 2 TensorCores: make sure the parallel grid has >= 2 steps.
    if Nb * (_round_up(Mn, tm) // tm) < 2 and tm > 128:
        tm = _round_up((tm + 1) // 2, 128)

    # Explicit VMEM budget (double-buffered patch + output tiles, resident
    # weight/bias); keep well under the 32 MiB scoped limit (v7x: 64 MiB phys).
    def _vmem_bytes(t):
        return 4 * (2 * (K_pad * t + C_out * t) + C_out * K_pad + C_out)

    while tm > 128 and _vmem_bytes(tm) > (16 << 20):
        tm = _round_up(tm // 2, 128)

    Mn_pad = _round_up(Mn, tm)

    patches = jnp.pad(patches, ((0, 0), (0, K_pad - K), (0, Mn_pad - Mn)))
    w_pad = jnp.pad(w_mat, ((0, 0), (0, K_pad - K))).astype(patches.dtype)
    b_col = bias.reshape(C_out, 1).astype(jnp.float32)

    out = pl.pallas_call(
        _conv_matmul_kernel,
        out_shape=jax.ShapeDtypeStruct((Nb, C_out, Mn_pad), patches.dtype),
        grid_spec=pltpu.PrefetchScalarGridSpec(
            num_scalar_prefetch=0,
            grid=(Nb, Mn_pad // tm),
            in_specs=[
                # Constant index_maps -> weight/bias fetched once, stay in VMEM.
                pl.BlockSpec((C_out, K_pad), lambda n, j: (0, 0)),
                pl.BlockSpec((C_out, 1), lambda n, j: (0, 0)),
                # Leading batch dim squeezed; kernel sees (K_pad, tm).
                pl.BlockSpec((None, K_pad, tm), lambda n, j: (n, 0, j)),
            ],
            out_specs=pl.BlockSpec((None, C_out, tm), lambda n, j: (n, 0, j)),
        ),
        compiler_params=pltpu.CompilerParams(
            dimension_semantics=("parallel", "parallel"),
            vmem_limit_bytes=32 * 1024 * 1024,
        ),
    )(w_pad, b_col, patches)
    return out[:, :, :Mn]


# ----------------------------------------------------------------------------
# Glue: im2col in (K, M) orientation, nearest-neighbor upsample
# ----------------------------------------------------------------------------
def _im2col_3d_km(x, kernel, stride, padding):
    """x: (Nb,C,D,H,W) -> patches (Nb, K, Do*Ho*Wo), (Do,Ho,Wo).

    K is ordered (c_in, kd, kh, kw), matching PyTorch's
    weight.reshape(C_out, C_in*kD*kH*kW) flattening.  Built directly in
    (K, M) orientation so no large transpose is needed afterwards.
    """
    Nb, C, D, H, W = x.shape
    kD, kH, kW = kernel
    sD, sH, sW = stride
    pD, pH, pW = padding

    xp = jnp.pad(x, ((0, 0), (0, 0), (pD, pD), (pH, pH), (pW, pW)))
    Do = (D + 2 * pD - kD) // sD + 1
    Ho = (H + 2 * pH - kH) // sH + 1
    Wo = (W + 2 * pW - kW) // sW + 1

    cols = []
    for kd in range(kD):
        for kh in range(kH):
            for kw in range(kW):
                cols.append(xp[:, :,
                               kd:kd + sD * Do:sD,
                               kh:kh + sH * Ho:sH,
                               kw:kw + sW * Wo:sW])      # (Nb, C, Do, Ho, Wo)
    patches = jnp.stack(cols, axis=2)                     # (Nb, C, kDkHkW, ...)
    patches = patches.reshape(Nb, C * kD * kH * kW, Do * Ho * Wo)
    return patches, (Do, Ho, Wo)


def _nearest_upsample_ncdhw(x, out_size):
    """PyTorch F.interpolate(mode='nearest') to `out_size` (D, H, W)."""
    Nb, C, Di, Hi, Wi = x.shape
    Do, Ho, Wo = out_size
    if Do % Di == 0 and Ho % Hi == 0 and Wo % Wi == 0:
        # Integral ratio: nearest (src = floor(dst*in/out)) == exact repeat.
        rd, rh, rw = Do // Di, Ho // Hi, Wo // Wi
        y = x[:, :, :, None, :, None, :, None]
        y = jnp.broadcast_to(y, (Nb, C, Di, rd, Hi, rh, Wi, rw))
        return y.reshape(Nb, C, Do, Ho, Wo)
    # Fallback (non-integral ratio): floor-index gather, PyTorch-exact.
    d_idx = jnp.clip((jnp.arange(Do) * Di) // Do, 0, Di - 1)
    h_idx = jnp.clip((jnp.arange(Ho) * Hi) // Ho, 0, Hi - 1)
    w_idx = jnp.clip((jnp.arange(Wo) * Wi) // Wo, 0, Wi - 1)
    x = jnp.take(x, d_idx, axis=2)
    x = jnp.take(x, h_idx, axis=3)
    x = jnp.take(x, w_idx, axis=4)
    return x


# ----------------------------------------------------------------------------
# ConvDeconv3d forward
# ----------------------------------------------------------------------------
@functools.partial(jax.jit, static_argnames=("stride", "padding"))
def conv_deconv3d(x, weight, bias, *, stride=(2, 2, 2), padding=(1, 1, 1)):
    """x: (N, C_in, D, H, W); weight: (C_out, C_in, kD, kH, kW); bias: (C_out,)."""
    Nb = x.shape[0]
    in_spatial = x.shape[-3:]
    C_out, C_in, kD, kH, kW = weight.shape

    patches, (Do, Ho, Wo) = _im2col_3d_km(x, (kD, kH, kW), stride, padding)
    w_mat = weight.reshape(C_out, C_in * kD * kH * kW)     # (C_out, K)

    conv = _pallas_conv_matmul(patches, w_mat, bias)       # (Nb, C_out, Mn)
    conv = conv.reshape(Nb, C_out, Do, Ho, Wo)             # pure reshape, NCDHW

    return _nearest_upsample_ncdhw(conv, in_spatial)


# ----------------------------------------------------------------------------
# Reference (pure JAX) for a correctness check
# ----------------------------------------------------------------------------
def _reference(x, weight, bias, stride, padding):
    conv = jax.lax.conv_general_dilated(
        x, weight,
        window_strides=stride,
        padding=[(p, p) for p in padding],
        dimension_numbers=("NCDHW", "OIDHW", "NCDHW"))
    conv = conv + bias.reshape(1, -1, 1, 1, 1)
    return _nearest_upsample_ncdhw(conv, x.shape[-3:])


if __name__ == "__main__":
    # Module config: ConvDeconv3d(in_channels=4, out_channels=8,
    #                             kernel_size=3, stride=2, padding=1)
    in_channels, out_channels = 4, 8
    kernel_size, stride, padding = (3, 3, 3), (2, 2, 2), (1, 1, 1)
    batch, D, H, W = 2, 16, 16, 16

    key = jax.random.PRNGKey(0)
    kx, kw, kb = jax.random.split(key, 3)

    x = jax.random.normal(kx, (batch, in_channels, D, H, W), dtype=jnp.float32)

    # Deterministic Conv3d-style init: U(-1/sqrt(fan_in), 1/sqrt(fan_in)).
    fan_in = in_channels * kernel_size[0] * kernel_size[1] * kernel_size[2]
    bound = 1.0 / (fan_in ** 0.5)
    weight = jax.random.uniform(
        kw, (out_channels, in_channels) + kernel_size,
        minval=-bound, maxval=bound, dtype=jnp.float32)
    bias = jax.random.uniform(
        kb, (out_channels,), minval=-bound, maxval=bound, dtype=jnp.float32)

    out = conv_deconv3d(x, weight, bias, stride=stride, padding=padding)
    out = jax.block_until_ready(out)

    ref = jax.block_until_ready(_reference(x, weight, bias, stride, padding))
    assert out.shape == (batch, out_channels, D, H, W), out.shape
    assert jnp.allclose(out, ref, atol=2e-4, rtol=2e-4), \
        float(jnp.max(jnp.abs(out - ref)))

    print("KERNEL_OK")
</pallas_src>

<mosaic_0001>
module attributes {stable_mosaic.version = 11 : i64} {
  func.func @_conv_matmul_kernel(%arg0: i32, %arg1: i32, %arg2: memref<8x128xf32, #tpu.memory_space<vmem>>, %arg3: memref<8x1xf32, #tpu.memory_space<vmem>>, %arg4: memref<1x128x512xf32, #tpu.memory_space<vmem>>, %arg5: memref<1x8x512xf32, #tpu.memory_space<vmem>>) attributes {dimension_semantics = [#tpu.dimension_semantics<parallel>, #tpu.dimension_semantics<parallel>], iteration_bounds = array<i64: 2, 1>, scalar_prefetch = 0 : i64, scratch_operands = 0 : i64, tpu.core_type = #tpu.core_type<tc>, window_params = [{pipeline_mode = #tpu.pipeline_mode<synchronous>, transform_indices = @transform_0, window_bounds = array<i64: 8, 128>}, {pipeline_mode = #tpu.pipeline_mode<synchronous>, transform_indices = @transform_1, window_bounds = array<i64: 8, 1>}, {transform_indices = @transform_2, window_bounds = array<i64: 1, 128, 512>}, {transform_indices = @transform_3, window_bounds = array<i64: 1, 8, 512>}]} {
    %c0 = arith.constant 0 : index
    %c0_0 = arith.constant 0 : index
    %0 = vector.load %arg2[%c0, %c0_0] : memref<8x128xf32, #tpu.memory_space<vmem>>, vector<8x128xf32>
    %c0_1 = arith.constant 0 : index
    %c0_2 = arith.constant 0 : index
    %c0_3 = arith.constant 0 : index
    %1 = vector.load %arg4[%c0_1, %c0_2, %c0_3] : memref<1x128x512xf32, #tpu.memory_space<vmem>>, vector<1x128x512xf32>
    %2 = vector.shape_cast %1 : vector<1x128x512xf32> to vector<128x512xf32>
    %cst = arith.constant dense<0.000000e+00> : vector<8x512xf32>
    %3 = tpu.matmul %0, %2, %cst {dimension_numbers = #tpu.dot_dimension_numbers<[1], [0], [0], [1], [0, 0, 1, 1], [], []>} : vector<8x128xf32>, vector<128x512xf32>, vector<8x512xf32> -> vector<8x512xf32>
    %c0_4 = arith.constant 0 : index
    %c0_5 = arith.constant 0 : index
    %4 = vector.load %arg3[%c0_4, %c0_5] : memref<8x1xf32, #tpu.memory_space<vmem>>, vector<8x1xf32>
    %5 = vector.broadcast %4 : vector<8x1xf32> to vector<8x512xf32>
    %6 = arith.addf %3, %5 : vector<8x512xf32>
    %c0_6 = arith.constant 0 : index
    %c0_7 = arith.constant 0 : index
    %c0_8 = arith.constant 0 : index
    %7 = vector.load %arg5[%c0_6, %c0_7, %c0_8] : memref<1x8x512xf32, #tpu.memory_space<vmem>>, vector<1x8x512xf32>
    %8 = vector.shape_cast %7 : vector<1x8x512xf32> to vector<8x512xf32>
    %9 = vector.shape_cast %6 : vector<8x512xf32> to vector<1x8x512xf32>
    tpu.vector_store %arg5[%c0_6, %c0_7, %c0_8], %9 {strides = array<i32>} : memref<1x8x512xf32, #tpu.memory_space<vmem>>, vector<1x8x512xf32>,
    return
  }
  func.func @transform_0(%arg0: i32, %arg1: i32) -> (i32, i32) {
    %c0_i32 = arith.constant 0 : i32
    %c0_i32_0 = arith.constant 0 : i32
    %c0_i32_1 = arith.constant 0 : i32
    return %c0_i32, %c0_i32_0 : i32, i32
  }
  func.func @transform_1(%arg0: i32, %arg1: i32) -> (i32, i32) {
    %c0_i32 = arith.constant 0 : i32
    %c0_i32_0 = arith.constant 0 : i32
    %c0_i32_1 = arith.constant 0 : i32
    return %c0_i32, %c0_i32_0 : i32, i32
  }
  func.func @transform_2(%arg0: i32, %arg1: i32) -> (i32, i32, i32) {
    %c0_i32 = arith.constant 0 : i32
    %c0_i32_0 = arith.constant 0 : i32
    return %arg0, %c0_i32, %arg1 : i32, i32, i32
  }
  func.func @transform_3(%arg0: i32, %arg1: i32) -> (i32, i32, i32) {
    %c0_i32 = arith.constant 0 : i32
    %c0_i32_0 = arith.constant 0 : i32
    return %arg0, %c0_i32, %arg1 : i32, i32, i32
  }
}

</mosaic_0001>

<llo_original>
// kernel: conv_deconv3d.1
$region0: #{conv_deconv3d.1}
  #allocation0 [shape = 'u32[]', space=smem, size = 0x4, offset = 0x4, fixed_abs, tag = 'smem constant byte address 0x4 - core index']
  #allocation1 [shape = 'u32[144,128]{1,0:T(1,128)}', space=vmem, size = 0x12000, scoped, tag = 'internal scratch']
  %s0 = inlined_call_operand.vmem [shape: f32[8,128], index: 0, kind: input, shape index: {}]
  %s1 = inlined_call_operand.vmem [shape: f32[8,1], index: 1, kind: input, shape index: {}]
  %s2 = inlined_call_operand.vmem [shape: f32[2,128,512], index: 2, kind: input, shape index: {}]
  %s3 = inlined_call_operand.vmem [shape: f32[2,8,512], index: 3, kind: output, shape index: {}]
  %s4 = sld [smem:[#allocation0]]
  $region45: #{conv_deconv3d.1} parent=0
    _
  %s6 = ssub.s32 1, %s4
  %s7 = scalar_select 0, %s6, %s4
  loop: start=0, step=1, limit=4
  $region2: #{conv_deconv3d.1} parent=0 // loop_pre_header
    _
  $region3: #{conv_deconv3d.1} parent=0 // loop_header
    %s9 = sphi 0, %s13
    %p10 = scmp.ge.s32.totalorder %s9, 4
    %s16 = sphi 0, %s28
    %s17 = sphi 0, %s24
    %s18 = sphi 0, %s16
    %s19 = sphi 0, %s17
    %s20 = sphi 0, %s18
    %s21 = sphi 0, %s19
    %s29 = sphi 0, %s29
    %s31 = sphi 0, %s29
    %s32 = sphi 0, %s31
    %s46 = sphi 0, %s32
    %s50 = sphi 0, %s50
    %s52 = sphi 0, %s50
    %s53 = sphi 0, %s52
    %s67 = sphi 0, %s53
    %s75 = sphi 0, %s77
    %s78 = sphi 0, %s75
    %s79 = sphi 0, %s78
    %s95 = sphi 0, %s79
    %s103 = sphi 0, %s105
    %s106 = sphi 0, %s103
    %s107 = sphi 0, %s106
    %s123 = sphi 0, %s107
  $region4: #{conv_deconv3d.1} parent=0 // loop_header_branch
    %12 = sbr.rel (%p10) target = $region8
  $region5: #{conv_deconv3d.1} parent=0 // loop_body
    %s14 = ssub.s32 %s9, 1
    %s15 = ssub.s32 %s9, 2
    %s22 = sadd.s32 1, %s17
    %p23 = scmp.ge.s32.totalorder %s22, 1
    %s24 = scalar_select %p23, 0, %s22
    %s25 = sadd.s32 1, %s16
    %s26 = scalar_select %p23, %s25, %s16
    %p27 = scmp.ge.s32.totalorder %s26, 2
    %s28 = scalar_select %p27, 0, %s26
    %s30 = sadd.s32 %s29, 1
    %p33 = scmp.eq.s32.totalorder %s9, 1
    %p34 = scmp.ne.s32.totalorder %s29, %s31
    %p35 = scmp.eq.s32.totalorder %s9, 0
    %p36 = por %p34, %p35
    %p37 = scmp.ne.s32.totalorder %s29, %s31
    %p38 = scmp.eq.s32.totalorder %s14, 1
    %p39 = por %p37, %p38
    %p40 = scmp.ne.s32.totalorder %s31, %s32
    %p41 = scmp.eq.s32.totalorder %s14, 0
    %p42 = por %p40, %p41
    %p43 = scmp.ne.s32.totalorder %s31, %s32
    %p44 = scmp.eq.s32.totalorder %s15, 1
    %p45 = por %p43, %p44
    %p47 = scmp.ne.s32.totalorder %s32, %s46
    %p48 = scmp.eq.s32.totalorder %s15, 0
    %p49 = por %p47, %p48
    %s51 = sadd.s32 %s50, 1
    %p54 = scmp.eq.s32.totalorder %s9, 1
    %p55 = scmp.ne.s32.totalorder %s50, %s52
    %p56 = scmp.eq.s32.totalorder %s9, 0
    %p57 = por %p55, %p56
    %p58 = scmp.ne.s32.totalorder %s50, %s52
    %p59 = scmp.eq.s32.totalorder %s14, 1
    %p60 = por %p58, %p59
    %p61 = scmp.ne.s32.totalorder %s52, %s53
    %p62 = scmp.eq.s32.totalorder %s14, 0
    %p63 = por %p61, %p62
    %p64 = scmp.ne.s32.totalorder %s52, %s53
    %p65 = scmp.eq.s32.totalorder %s15, 1
    %p66 = por %p64, %p65
    %p68 = scmp.ne.s32.totalorder %s53, %s67
    %p69 = scmp.eq.s32.totalorder %s15, 0
    %p70 = por %p68, %p69
    %s71 = ssub.s32 %s16, %s28
    %s72 = ssub.s32 %s17, %s24
    %s73 = sor.u32 %s71, %s72
    %p74 = scmp.eq.s32.totalorder %s73, 0
    %s76 = sadd.s32 %s75, 1
    %s77 = scalar_select %p74, %s75, %s76
    %p80 = pneg %p74
    %p81 = scmp.eq.s32.totalorder %s9, 1
    %p82 = por %p80, %p81
    %p83 = scmp.ne.s32.totalorder %s75, %s78
    %p84 = scmp.eq.s32.totalorder %s9, 0
    %p85 = por %p83, %p84
    %p86 = scmp.ne.s32.totalorder %s75, %s78
    %p87 = scmp.eq.s32.totalorder %s14, 1
    %p88 = por %p86, %p87
    %p89 = scmp.ne.s32.totalorder %s78, %s79
    %p90 = scmp.eq.s32.totalorder %s14, 0
    %p91 = por %p89, %p90
    %p92 = scmp.ne.s32.totalorder %s78, %s79
    %p93 = scmp.eq.s32.totalorder %s15, 1
    %p94 = por %p92, %p93
    %p96 = scmp.ne.s32.totalorder %s79, %s95
    %p97 = scmp.eq.s32.totalorder %s15, 0
    %p98 = por %p96, %p97
    %s99 = ssub.s32 %s16, %s28
    %s100 = ssub.s32 %s17, %s24
    %s101 = sor.u32 %s99, %s100
    %p102 = scmp.eq.s32.totalorder %s101, 0
    %s104 = sadd.s32 %s103, 1
    %s105 = scalar_select %p102, %s103, %s104
    %p108 = pneg %p102
    %p109 = scmp.eq.s32.totalorder %s9, 1
    %p110 = por %p108, %p109
    %p111 = scmp.ne.s32.totalorder %s103, %s106
    %p112 = scmp.eq.s32.totalorder %s9, 0
    %p113 = por %p111, %p112
    %p114 = scmp.ne.s32.totalorder %s103, %s106
    %p115 = scmp.eq.s32.totalorder %s14, 1
    %p116 = por %p114, %p115
    %p117 = scmp.ne.s32.totalorder %s106, %s107
    %p118 = scmp.eq.s32.totalorder %s14, 0
    %p119 = por %p117, %p118
    %p120 = scmp.ne.s32.totalorder %s106, %s107
    %p121 = scmp.eq.s32.totalorder %s15, 1
    %p122 = por %p120, %p121
    %p124 = scmp.ne.s32.totalorder %s107, %s123
    %p125 = scmp.eq.s32.totalorder %s15, 0
    %p126 = por %p124, %p125
    %p127 = scmp.le.s32.totalorder 1, %s9
    %p128 = scmp.lt.s32.totalorder %s9, 3
    %p129 = pnand %p127, %p128
    %p130 = pneg %p129
    // Predicated region
    $region9: #{conv_deconv3d.1} parent=5 // pred_check
      _
    $region10: #{conv_deconv3d.1} parent=5 // pred_check_branch
      %132 = sbr.rel (%p129) target = $region12
    $region11: #{conv_deconv3d.1} parent=5 // pred_region
      %s133 = ssub.s32 %s9, 1
      // Predicated region
      $region13: #{conv_deconv3d.1} parent=11 // pred_check
        %p134 = pneg %p42
      $region14: #{conv_deconv3d.1} parent=11 // pred_check_branch
        %136 = sbr.rel (%p134) target = $region16
      $region15: #{conv_deconv3d.1} parent=11 // pred_region
        _
      $region16: #{conv_deconv3d.1} parent=11 // pred_fallthru
        _
      // Predicated region
      $region17: #{conv_deconv3d.1} parent=11 // pred_check
        %p137 = pneg %p63
      $region18: #{conv_deconv3d.1} parent=11 // pred_check_branch
        %139 = sbr.rel (%p137) target = $region20
      $region19: #{conv_deconv3d.1} parent=11 // pred_region
        _
      $region20: #{conv_deconv3d.1} parent=11 // pred_fallthru
        _
    $region12: #{conv_deconv3d.1} parent=5 // pred_fallthru
      _
    %p140 = scmp.lt.s32.totalorder %s9, 2
    // Predicated region
    $region21: #{conv_deconv3d.1} parent=5 // pred_check
      %p141 = pneg %p140
    $region22: #{conv_deconv3d.1} parent=5 // pred_check_branch
      %143 = sbr.rel (%p141) target = $region24
    $region23: #{conv_deconv3d.1} parent=5 // pred_region
      // Predicated region
      $region25: #{conv_deconv3d.1} parent=23 // pred_check
        %p144 = pneg %p85
      $region26: #{conv_deconv3d.1} parent=23 // pred_check_branch
        %146 = sbr.rel (%p144) target = $region28
      $region27: #{conv_deconv3d.1} parent=23 // pred_region
        %s147 = smul.u32 4, %s17
        %p148 = scmp.lt.s32.totalorder %s16, 1
        %s149 = scalar_select %p148, %s16, 1
        %p150 = scmp.lt.s32.totalorder %s147, 3
        %s151 = scalar_select %p150, %s147, 3
        %s152 = smul.addr %s149, 64
        %s153 = sadd.s32 %s151, %s152
        %s154 = smul.addr %s153, 8
        %s155 = scalar_lea.vmem %s2, %s154
        %s156 = smul.u32 4, %s17
      $region28: #{conv_deconv3d.1} parent=23 // pred_fallthru
        _
    $region24: #{conv_deconv3d.1} parent=5 // pred_fallthru
      _
    %p157 = scmp.le.s32.totalorder 1, %s9
    %p158 = scmp.lt.s32.totalorder %s9, 3
    %p159 = pnand %p157, %p158
    %p160 = pneg %p159
    // Predicated region
    $region29: #{conv_deconv3d.1} parent=5 // pred_check
      _
    $region30: #{conv_deconv3d.1} parent=5 // pred_check_branch
      %162 = sbr.rel (%p159) target = $region32
    $region31: #{conv_deconv3d.1} parent=5 // pred_region
      %s163 = ssub.s32 %s9, 1
      %p164 = pneg %p42
      %p165 = pneg %p39
      %p166 = pneg %p63
      %p167 = pneg %p60
      %s168 = smul.u32 4, %s19
      %p169 = scmp.lt.s32.totalorder %s18, 1
      %s170 = scalar_select %p169, %s18, 1
      %p171 = scmp.lt.s32.totalorder %s168, 3
      %s172 = scalar_select %p171, %s168, 3
      %s173 = smul.addr %s170, 64
      %s174 = sadd.s32 %s172, %s173
      %s175 = smul.addr %s174, 8
      %s176 = scalar_lea.vmem %s2, %s175
      %p177 = pneg %p91
      %p178 = pneg %p88
      %p179 = pneg %p119
      %p180 = pneg %p116
      %s181 = smul.u32 4, %s19
      %p182 = scmp.lt.s32.totalorder %s18, 1
      %s183 = scalar_select %p182, %s18, 1
      %p184 = scmp.lt.s32.totalorder %s181, 3
      %s185 = scalar_select %p184, %s181, 3
      %s186 = smul.addr %s183, 4
      %s187 = sadd.s32 %s185, %s186
      %s188 = smul.addr %s187, 8
      %s189 = scalar_lea.vmem %s3, %s188
      %s190 = smul.u32 4, %s19
      %p191 = scmp.lt.s32.totalorder %s18, 1
      %s192 = scalar_select %p191, %s18, 1
      %p193 = scmp.lt.s32.totalorder %s190, 3
      %s194 = scalar_select %p193, %s190, 3
      %s195 = smul.addr %s192, 64
      %s196 = sadd.s32 %s194, %s195
      %s197 = smul.addr %s196, 8
      %s198 = scalar_lea.vmem %s2, %s197
      %s199 = smul.u32 4, %s19
      %s200 = smul.u32 4, %s19
      %p201 = scmp.lt.s32.totalorder %s18, 1
      %s202 = scalar_select %p201, %s18, 1
      %p203 = scmp.lt.s32.totalorder %s200, 3
      %s204 = scalar_select %p203, %s200, 3
      %s205 = smul.addr %s202, 4
      %s206 = sadd.s32 %s204, %s205
      %s207 = smul.addr %s206, 8
      %s208 = scalar_lea.vmem %s3, %s207
      %s209 = smul.u32 4, %s19
      %v210 = vld [vmem:[%s0] sm:$0xff]
      %v211 = vld [vmem:[%s198] sm:$0xff]
      %v212 = vld [vmem:[%s198 + $0x8] sm:$0xff]
      %v213 = vld [vmem:[%s198 + $0x10] sm:$0xff]
      %v214 = vld [vmem:[%s198 + $0x18] sm:$0xff]
      %v215 = vld [vmem:[%s198 + $0x20] sm:$0xff]
      %v216 = vld [vmem:[%s198 + $0x28] sm:$0xff]
      %v217 = vld [vmem:[%s198 + $0x30] sm:$0xff]
      %v218 = vld [vmem:[%s198 + $0x38] sm:$0xff]
      %v219 = vld [vmem:[%s198 + $0x40] sm:$0xff]
      %v220 = vld [vmem:[%s198 + $0x48] sm:$0xff]
      %v221 = vld [vmem:[%s198 + $0x50] sm:$0xff]
      %v222 = vld [vmem:[%s198 + $0x58] sm:$0xff]
      %v223 = vld [vmem:[%s198 + $0x60] sm:$0xff]
      %v224 = vld [vmem:[%s198 + $0x68] sm:$0xff]
      %v225 = vld [vmem:[%s198 + $0x70] sm:$0xff]
      %v226 = vld [vmem:[%s198 + $0x78] sm:$0xff]
      %v227 = vld [vmem:[%s198 + $0x80] sm:$0xff]
      %v228 = vld [vmem:[%s198 + $0x88] sm:$0xff]
      %v229 = vld [vmem:[%s198 + $0x90] sm:$0xff]
      %v230 = vld [vmem:[%s198 + $0x98] sm:$0xff]
      %v231 = vld [vmem:[%s198 + $0xa0] sm:$0xff]
      %v232 = vld [vmem:[%s198 + $0xa8] sm:$0xff]
      %v233 = vld [vmem:[%s198 + $0xb0] sm:$0xff]
      %v234 = vld [vmem:[%s198 + $0xb8] sm:$0xff]
      %v235 = vld [vmem:[%s198 + $0xc0] sm:$0xff]
      %v236 = vld [vmem:[%s198 + $0xc8] sm:$0xff]
      %v237 = vld [vmem:[%s198 + $0xd0] sm:$0xff]
      %v238 = vld [vmem:[%s198 + $0xd8] sm:$0xff]
      %v239 = vld [vmem:[%s198 + $0xe0] sm:$0xff]
      %v240 = vld [vmem:[%s198 + $0xe8] sm:$0xff]
      %v241 = vld [vmem:[%s198 + $0xf0] sm:$0xff]
      %v242 = vld [vmem:[%s198 + $0xf8] sm:$0xff]
      %v243 = vld [vmem:[%s198 + $0x100] sm:$0xff]
      %v244 = vld [vmem:[%s198 + $0x108] sm:$0xff]
      %v245 = vld [vmem:[%s198 + $0x110] sm:$0xff]
      %v246 = vld [vmem:[%s198 + $0x118] sm:$0xff]
      %v247 = vld [vmem:[%s198 + $0x120] sm:$0xff]
      %v248 = vld [vmem:[%s198 + $0x128] sm:$0xff]
      %v249 = vld [vmem:[%s198 + $0x130] sm:$0xff]
      %v250 = vld [vmem:[%s198 + $0x138] sm:$0xff]
      %v251 = vld [vmem:[%s198 + $0x140] sm:$0xff]
      %v252 = vld [vmem:[%s198 + $0x148] sm:$0xff]
      %v253 = vld [vmem:[%s198 + $0x150] sm:$0xff]
      %v254 = vld [vmem:[%s198 + $0x158] sm:$0xff]
      %v255 = vld [vmem:[%s198 + $0x160] sm:$0xff]
      %v256 = vld [vmem:[%s198 + $0x168] sm:$0xff]
      %v257 = vld [vmem:[%s198 + $0x170] sm:$0xff]
      %v258 = vld [vmem:[%s198 + $0x178] sm:$0xff]
      %v259 = vld [vmem:[%s198 + $0x180] sm:$0xff]
      %v260 = vld [vmem:[%s198 + $0x188] sm:$0xff]
      %v261 = vld [vmem:[%s198 + $0x190] sm:$0xff]
      %v262 = vld [vmem:[%s198 + $0x198] sm:$0xff]
      %v263 = vld [vmem:[%s198 + $0x1a0] sm:$0xff]
      %v264 = vld [vmem:[%s198 + $0x1a8] sm:$0xff]
      %v265 = vld [vmem:[%s198 + $0x1b0] sm:$0xff]
      %v266 = vld [vmem:[%s198 + $0x1b8] sm:$0xff]
      %v267 = vld [vmem:[%s198 + $0x1c0] sm:$0xff]
      %v268 = vld [vmem:[%s198 + $0x1c8] sm:$0xff]
      %v269 = vld [vmem:[%s198 + $0x1d0] sm:$0xff]
      %v270 = vld [vmem:[%s198 + $0x1d8] sm:$0xff]
      %v271 = vld [vmem:[%s198 + $0x1e0] sm:$0xff]
      %v272 = vld [vmem:[%s198 + $0x1e8] sm:$0xff]
      %v273 = vld [vmem:[%s198 + $0x1f0] sm:$0xff]
      %v274 = vld [vmem:[%s198 + $0x1f8] sm:$0xff]
      %v275 = vld [vmem:[%s1] sm:$0xff]
      %277 = vset.pattern.permute.xlu0 0
      %278 = vperm.xlu0 %277, %v275
      %v279 = vpop.permute.xlu0 %278
      %281 = vmatprep.subr.mxu0 %v212
      %282 = vmatpush1.msra.mxu0 %v211
      %283 = vmatprep.subr.mxu0 %v216
      %284 = vmatpush1.msra.mxu0 %v215
      %285 = vmatprep.subr.mxu0 %v220
      %286 = vmatpush1.msra.mxu0 %v219
      %287 = vmatprep.subr.mxu0 %v224
      %288 = vmatpush1.msra.mxu0 %v223
      %289 = vmatprep.subr.mxu0 %v228
      %290 = vmatpush1.msra.mxu0 %v227
      %291 = vmatprep.subr.mxu0 %v232
      %292 = vmatpush1.msra.mxu0 %v231
      %293 = vmatprep.subr.mxu0 %v236
      %294 = vmatpush1.msra.mxu0 %v235
      %295 = vmatprep.subr.mxu0 %v240
      %296 = vmatpush1.msra.mxu0 %v239
      %297 = vmatprep.subr.mxu0 %v244
      %298 = vmatpush1.msra.mxu0 %v243
      %299 = vmatprep.subr.mxu0 %v248
      %300 = vmatpush1.msra.mxu0 %v247
      %301 = vmatprep.subr.mxu0 %v252
      %302 = vmatpush1.msra.mxu0 %v251
      %303 = vmatprep.subr.mxu0 %v256
      %304 = vmatpush1.msra.mxu0 %v255
      %305 = vmatprep.subr.mxu0 %v260
      %306 = vmatpush1.msra.mxu0 %v259
      %307 = vmatprep.subr.mxu0 %v264
      %308 = vmatpush1.msra.mxu0 %v263
      %309 = vmatprep.subr.mxu0 %v268
      %310 = vmatpush1.msra.mxu0 %v267
      %311 = vmatprep.subr.mxu0 %v272
      %312 = vmatpush1.msra.mxu0 %v271
      %313 = vmatprep.subr.mxu0 0.0
      %314 = vmatpush1.msra.mxu0 0.0
      %315 = vmatprep.subr.mxu0 0.0
      %316 = vmatpush1.msra.mxu0 0.0
      %317 = vmatprep.subr.mxu0 0.0
      %318 = vmatpush1.msra.mxu0 0.0
      %319 = vmatprep.subr.mxu0 0.0
      %320 = vmatpush1.msra.mxu0 0.0
      %321 = vmatprep.subr.mxu0 0.0
      %322 = vmatpush1.msra.mxu0 0.0
      %323 = vmatprep.subr.mxu0 0.0
      %324 = vmatpush1.msra.mxu0 0.0
      %325 = vmatprep.subr.mxu0 0.0
      %326 = vmatpush1.msra.mxu0 0.0
      %327 = vmatprep.subr.mxu0 0.0
      %328 = vmatpush1.msra.mxu0 0.0
      %329 = vmatprep.subr.mxu0 0.0
      %330 = vmatpush1.msra.mxu0 0.0
      %331 = vmatprep.subr.mxu0 0.0
      %332 = vmatpush1.msra.mxu0 0.0
      %333 = vmatprep.subr.mxu0 0.0
      %334 = vmatpush1.msra.mxu0 0.0
      %335 = vmatprep.subr.mxu0 0.0
      %336 = vmatpush1.msra.mxu0 0.0
      %337 = vmatprep.subr.mxu0 0.0
      %338 = vmatpush1.msra.mxu0 0.0
      %339 = vmatprep.subr.mxu0 0.0
      %340 = vmatpush1.msra.mxu0 0.0
      %341 = vmatprep.subr.mxu0 0.0
      %342 = vmatpush1.msra.mxu0 0.0
      %343 = vmatprep.subr.mxu0 0.0
      %344 = vmatpush1.msra.mxu0 0.0
      %345 = vmatprep.mubr.f32.mxu0 0.0
      %346 = vmatmul.mubr.f32.gmra.mrb[0].mxu0 %v210
      %v347 = vpop.f32.mrb[0].mxu0
      %v348 = vadd.f32 %v279, %v347
      %v349 = vpop.f32.mrb[0].mxu0
      %v350 = vadd.f32 %v279, %v349
      %351 = vdwg.mxu0
      %352 = vmatprep.subr.mxu0 %v214
      %353 = vmatpush1.msra.mxu0 %v213
      %354 = vmatprep.subr.mxu0 %v218
      %355 = vmatpush1.msra.mxu0 %v217
      %356 = vmatprep.subr.mxu0 %v222
      %357 = vmatpush1.msra.mxu0 %v221
      %358 = vmatprep.subr.mxu0 %v226
      %359 = vmatpush1.msra.mxu0 %v225
      %360 = vmatprep.subr.mxu0 %v230
      %361 = vmatpush1.msra.mxu0 %v229
      %362 = vmatprep.subr.mxu0 %v234
      %363 = vmatpush1.msra.mxu0 %v233
      %364 = vmatprep.subr.mxu0 %v238
      %365 = vmatpush1.msra.mxu0 %v237
      %366 = vmatprep.subr.mxu0 %v242
      %367 = vmatpush1.msra.mxu0 %v241
      %368 = vmatprep.subr.mxu0 %v246
      %369 = vmatpush1.msra.mxu0 %v245
      %370 = vmatprep.subr.mxu0 %v250
      %371 = vmatpush1.msra.mxu0 %v249
      %372 = vmatprep.subr.mxu0 %v254
      %373 = vmatpush1.msra.mxu0 %v253
      %374 = vmatprep.subr.mxu0 %v258
      %375 = vmatpush1.msra.mxu0 %v257
      %376 = vmatprep.subr.mxu0 %v262
      %377 = vmatpush1.msra.mxu0 %v261
      %378 = vmatprep.subr.mxu0 %v266
      %379 = vmatpush1.msra.mxu0 %v265
      %380 = vmatprep.subr.mxu0 %v270
      %381 = vmatpush1.msra.mxu0 %v269
      %382 = vmatprep.subr.mxu0 %v274
      %383 = vmatpush1.msra.mxu0 %v273
      %384 = vmatprep.subr.mxu0 0.0
      %385 = vmatpush1.msra.mxu0 0.0
      %386 = vmatprep.subr.mxu0 0.0
      %387 = vmatpush1.msra.mxu0 0.0
      %388 = vmatprep.subr.mxu0 0.0
      %389 = vmatpush1.msra.mxu0 0.0
      %390 = vmatprep.subr.mxu0 0.0
      %391 = vmatpush1.msra.mxu0 0.0
      %392 = vmatprep.subr.mxu0 0.0
      %393 = vmatpush1.msra.mxu0 0.0
      %394 = vmatprep.subr.mxu0 0.0
      %395 = vmatpush1.msra.mxu0 0.0
      %396 = vmatprep.subr.mxu0 0.0
      %397 = vmatpush1.msra.mxu0 0.0
      %398 = vmatprep.subr.mxu0 0.0
      %399 = vmatpush1.msra.mxu0 0.0
      %400 = vmatprep.subr.mxu0 0.0
      %401 = vmatpush1.msra.mxu0 0.0
      %402 = vmatprep.subr.mxu0 0.0
      %403 = vmatpush1.msra.mxu0 0.0
      %404 = vmatprep.subr.mxu0 0.0
      %405 = vmatpush1.msra.mxu0 0.0
      %406 = vmatprep.subr.mxu0 0.0
      %407 = vmatpush1.msra.mxu0 0.0
      %408 = vmatprep.subr.mxu0 0.0
      %409 = vmatpush1.msra.mxu0 0.0
      %410 = vmatprep.subr.mxu0 0.0
      %411 = vmatpush1.msra.mxu0 0.0
      %412 = vmatprep.subr.mxu0 0.0
      %413 = vmatpush1.msra.mxu0 0.0
      %414 = vmatprep.subr.mxu0 0.0
      %415 = vmatpush1.msra.mxu0 0.0
      %416 = vmatprep.mubr.f32.mxu0 0.0
      %417 = vmatmul.mubr.f32.gmra.mrb[0].mxu0 %v210
      %v418 = vpop.f32.mrb[0].mxu0
      %v419 = vadd.f32 %v279, %v418
      %v420 = vpop.f32.mrb[0].mxu0
      %v421 = vadd.f32 %v279, %v420
      %422 = vdwg.mxu0
      %423 = vst [vmem:[%s208] sm:$0xff] %v348
      %424 = vst [vmem:[%s208 + $0x8] sm:$0xff] %v350
      %425 = vst [vmem:[%s208 + $0x10] sm:$0xff] %v419
      %426 = vst [vmem:[%s208 + $0x18] sm:$0xff] %v421
      %s427 = smul.u32 4, %s19
      %p428 = scmp.lt.s32.totalorder %s18, 1
      %s429 = scalar_select %p428, %s18, 1
      %p430 = scmp.lt.s32.totalorder %s427, 3
      %s431 = scalar_select %p430, %s427, 3
      %s432 = smul.addr %s429, 4
      %s433 = sadd.s32 %s431, %s432
      %s434 = smul.addr %s433, 8
      %s435 = scalar_lea.vmem %s3, %s434
      // Predicated region
      $region33: #{conv_deconv3d.1} parent=31 // pred_check
        %p436 = pneg %p116
      $region34: #{conv_deconv3d.1} parent=31 // pred_check_branch
        %438 = sbr.rel (%p436) target = $region36
      $region35: #{conv_deconv3d.1} parent=31 // pred_region
        %s439 = smul.u32 4, %s19
      $region36: #{conv_deconv3d.1} parent=31 // pred_fallthru
        _
    $region32: #{conv_deconv3d.1} parent=5 // pred_fallthru
      _
    %p440 = scmp.le.s32.totalorder 2, %s9
    // Predicated region
    $region37: #{conv_deconv3d.1} parent=5 // pred_check
      %p441 = pneg %p440
    $region38: #{conv_deconv3d.1} parent=5 // pred_check_branch
      %443 = sbr.rel (%p441) target = $region40
    $region39: #{conv_deconv3d.1} parent=5 // pred_region
      %s444 = ssub.s32 %s9, 2
      // Predicated region
      $region41: #{conv_deconv3d.1} parent=39 // pred_check
        %p445 = pneg %p122
      $region42: #{conv_deconv3d.1} parent=39 // pred_check_branch
        %447 = sbr.rel (%p445) target = $region44
      $region43: #{conv_deconv3d.1} parent=39 // pred_region
        %s448 = smul.u32 4, %s21
        %p449 = scmp.lt.s32.totalorder %s20, 1
        %s450 = scalar_select %p449, %s20, 1
        %p451 = scmp.lt.s32.totalorder %s448, 3
        %s452 = scalar_select %p451, %s448, 3
        %s453 = smul.addr %s450, 4
        %s454 = sadd.s32 %s452, %s453
        %s455 = smul.addr %s454, 8
        %s456 = scalar_lea.vmem %s3, %s455
      $region44: #{conv_deconv3d.1} parent=39 // pred_fallthru
        _
    $region40: #{conv_deconv3d.1} parent=5 // pred_fallthru
      _
  $region6: #{conv_deconv3d.1} parent=0 // loop_footer
    %s13 = sadd.s32 1, %s9
  $region7: #{conv_deconv3d.1} parent=0 // loop_footer_branch
    %8 = sbr.rel target = $region3
  $region8: #{conv_deconv3d.1} parent=0 // loop_exit
    _

</llo_original>
